<compile_context>
chip_gen: v7x
topology: tpu7x:2x2x1
jax: 0.10.0
libtpu: 0.0.40
codegen_flags: <defaults>
</compile_context>

<pallas_src>
import jax
import jax.numpy as jnp
from jax.experimental import pallas as pl
from jax.experimental.pallas import tpu as pltpu


def _round_up(x, m):
    return (x + m - 1) // m * m


def _convT_matmul_kernel(x_ref, w_ref, b_ref, o_ref):
    # x_ref: (TM, C)   flattened spatial rows x channels-in (full K extent)
    # w_ref: (C, TN)   channels-in x a 128-multiple slab of (kh*kw*cout)
    # b_ref: (1, TN)   bias tiled per (kh, kw), zero padded
    # o_ref: (TM, TN)  lane-dense output tile
    o_ref[...] = (
        jnp.dot(x_ref[...], w_ref[...], preferred_element_type=jnp.float32)
        + b_ref[...]
    )


def _vmem_bytes(tm, tn, c):
    # Conservative f32 footprint: double-buffered x and out tiles, up to two
    # resident copies of the weight/bias slab.
    return 4 * (2 * tm * c + 2 * tm * tn + 2 * c * tn + 2 * tn)


def _tpu_vmem_capacity_bytes():
    try:
        return int(pltpu.get_tpu_info().vmem_capacity_bytes)
    except Exception:
        return 128 * 1024 * 1024  # conservative default (v5e/v6e)


def conv_transpose_2x2_s2_pallas(x_nchw, weight, bias):
    """ConvTranspose2d(in_ch, out_ch, kernel_size=2, stride=2) via Pallas matmul.

    x_nchw: (N, C_in, H, W) float32
    weight: (C_in, C_out, 2, 2) float32  (PyTorch ConvTranspose2d layout)
    bias:   (C_out,) float32
    returns (N, C_out, 2H, 2W) float32
    """
    N, C, H, W = x_nchw.shape
    Cout = weight.shape[1]
    Ncols = 4 * Cout

    # ---- flatten input to (M, C), rows ordered (n, h, w); no K padding ----
    M = N * H * W
    x_flat = jnp.transpose(x_nchw, (0, 2, 3, 1)).reshape(M, C)

    # ---- weight / bias: columns ordered (kh, kw, cout), pad cols to 128 ----
    Np = _round_up(Ncols, 128)
    w_flat = jnp.transpose(weight, (0, 2, 3, 1)).reshape(C, Ncols)
    w_flat = jnp.pad(w_flat, ((0, 0), (0, Np - Ncols)))
    b_flat = jnp.pad(jnp.tile(bias, 4), (0, Np - Ncols)).reshape(1, Np)

    # ---- tile selection (per-generation VMEM aware) ----
    vmem_cap = _tpu_vmem_capacity_bytes()
    vmem_budget = (vmem_cap * 3) // 4          # leave compiler headroom
    tm_cap = 1024 if vmem_cap >= 96 * 1024 * 1024 else 512

    M8 = _round_up(M, 8)
    if M8 <= 256:
        TM = M8                                 # tiny layer: one small tile
    else:
        # At least two row tiles so the second TensorCore (v7x) has work.
        TM = min(tm_cap, _round_up((M8 + 1) // 2, 8))

    # Column tile: keep the whole weight slab resident (TN = Np) whenever it
    # fits the budget, so it is DMA'd exactly once.  Shrink TM first, then TN.
    TN = Np
    while _vmem_bytes(TM, TN, C) > vmem_budget and TM > 256:
        TM = _round_up(TM // 2, 8)
    if _vmem_bytes(TM, TN, C) > vmem_budget:
        tn = Np
        while tn > 128 and (Np % tn != 0 or _vmem_bytes(TM, tn, C) > vmem_budget):
            tn -= 128
        TN = max(tn, 128)

    Mp = _round_up(M, TM)
    if Mp != M:
        x_flat = jnp.pad(x_flat, ((0, Mp - M), (0, 0)))  # ragged tail only

    n_col_tiles = Np // TN
    n_row_tiles = Mp // TM
    grid = (n_col_tiles, n_row_tiles)   # column axis OUTER: weight changes slowly

    need = _vmem_bytes(TM, TN, C)
    vmem_limit = int(min(vmem_budget, max(need + need // 4, 32 * 1024 * 1024)))

    cost = pl.CostEstimate(
        flops=2 * Mp * C * Np,
        transcendentals=0,
        bytes_accessed=4 * (Mp * C * n_col_tiles + C * Np + Np + Mp * Np),
    )

    out_p = pl.pallas_call(
        _convT_matmul_kernel,
        out_shape=jax.ShapeDtypeStruct((Mp, Np), jnp.float32),
        grid_spec=pl.GridSpec(
            grid=grid,
            in_specs=[
                pl.BlockSpec((TM, C), lambda j, i: (i, 0)),   # full-K x tile
                pl.BlockSpec((C, TN), lambda j, i: (0, j)),   # resident weight slab
                pl.BlockSpec((1, TN), lambda j, i: (0, j)),   # resident bias slab
            ],
            out_specs=pl.BlockSpec((TM, TN), lambda j, i: (i, j)),
        ),
        compiler_params=pltpu.CompilerParams(
            dimension_semantics=("parallel", "parallel"),
            vmem_limit_bytes=vmem_limit,
        ),
        cost_estimate=cost,
    )(x_flat, w_flat, b_flat)

    # Slice off padding and scatter the 2x2 windows back to NCHW spatial
    # positions: (n,h,w,kh,kw,o) -> (n,o,2h+kh,2w+kw).
    y = out_p[:M, :Ncols].reshape(N, H, W, 2, 2, Cout)
    y = jnp.transpose(y, (0, 5, 1, 3, 2, 4)).reshape(N, Cout, 2 * H, 2 * W)
    return y


def up_forward(x1, x2, weight, bias):
    """Equivalent of Up.forward (nearest=False): upsample x1, pad, concat with x2."""
    # TODO(synk): the nearest=True (nn.Upsample) branch of the module is not
    # implemented here; the module default (ConvTranspose2d) path is.
    x1_up = conv_transpose_2x2_s2_pallas(x1, weight, bias)

    diffY = x2.shape[2] - x1_up.shape[2]
    diffX = x2.shape[3] - x1_up.shape[3]
    # F.pad(x1, [left, right, top, bottom]) — zero padding on W then H.
    x1_up = jnp.pad(
        x1_up,
        ((0, 0), (0, 0),
         (diffY // 2, diffY - diffY // 2),
         (diffX // 2, diffX - diffX // 2)),
    )
    # torch.cat([x2, x1], dim=1)
    return jnp.concatenate([x2, x1_up], axis=1)


def _reference(x1, x2, weight, bias):
    """Pure-JAX reference for the same math (via einsum, no Pallas)."""
    N, C, H, W = x1.shape
    Cout = weight.shape[1]
    y = jnp.einsum('nchw,coij->nohiwj', x1, weight).reshape(N, Cout, 2 * H, 2 * W)
    y = y + bias[None, :, None, None]
    diffY = x2.shape[2] - y.shape[2]
    diffX = x2.shape[3] - y.shape[3]
    y = jnp.pad(y, ((0, 0), (0, 0),
                    (diffY // 2, diffY - diffY // 2),
                    (diffX // 2, diffX - diffX // 2)))
    return jnp.concatenate([x2, y], axis=1)


if __name__ == "__main__":
    key = jax.random.PRNGKey(0)
    k1, k2, k3, k4 = jax.random.split(key, 4)

    in_ch = 4
    out_ch = in_ch // 2

    # x1: tensor to upsample; x2: skip connection (slightly larger spatially
    # so the zero-pad path is exercised: diffY=1, diffX=2).
    x1 = jax.random.normal(k1, (2, in_ch, 8, 8), dtype=jnp.float32)
    x2 = jax.random.normal(k2, (2, out_ch, 17, 18), dtype=jnp.float32)

    # Deterministic ConvTranspose2d parameters (PyTorch layout: (in, out, kH, kW)).
    weight = 0.1 * jax.random.normal(k3, (in_ch, out_ch, 2, 2), dtype=jnp.float32)
    bias = 0.1 * jax.random.normal(k4, (out_ch,), dtype=jnp.float32)

    out = up_forward(x1, x2, weight, bias)
    out = jax.block_until_ready(out)

    ref = _reference(x1, x2, weight, bias)
    assert out.shape == (2, in_ch, 17, 18), out.shape
    assert jnp.allclose(out, ref, rtol=1e-5, atol=1e-5), "mismatch vs reference"

    # Ragged-M shape (M = 2*10*13 = 260, not a multiple of 128 or 8).
    x1b = jax.random.normal(k1, (2, in_ch, 10, 13), dtype=jnp.float32)
    x2b = jax.random.normal(k2, (2, out_ch, 21, 27), dtype=jnp.float32)
    outb = jax.block_until_ready(up_forward(x1b, x2b, weight, bias))
    refb = _reference(x1b, x2b, weight, bias)
    assert jnp.allclose(outb, refb, rtol=1e-5, atol=1e-5), "mismatch (ragged M)"

    # Larger shape exercising the multi-row-tile (>=2 'parallel' blocks) path
    # with the weight slab resident across all row tiles.
    in_ch_c, out_ch_c = 32, 16
    x1c = jax.random.normal(k1, (2, in_ch_c, 32, 32), dtype=jnp.float32)
    x2c = jax.random.normal(k2, (2, out_ch_c, 64, 64), dtype=jnp.float32)
    wc = 0.05 * jax.random.normal(k3, (in_ch_c, out_ch_c, 2, 2), dtype=jnp.float32)
    bc = 0.05 * jax.random.normal(k4, (out_ch_c,), dtype=jnp.float32)
    outc = jax.block_until_ready(up_forward(x1c, x2c, wc, bc))
    refc = _reference(x1c, x2c, wc, bc)
    assert jnp.allclose(outc, refc, rtol=1e-5, atol=1e-5), "mismatch (multi-tile)"

    print("KERNEL_OK")
</pallas_src>

<mosaic_0001>
module attributes {stable_mosaic.version = 11 : i64} {
  func.func @_convT_matmul_kernel(%arg0: i32, %arg1: i32, %arg2: memref<128x4xf32, #tpu.memory_space<vmem>>, %arg3: memref<4x128xf32, #tpu.memory_space<vmem>>, %arg4: memref<1x128xf32, #tpu.memory_space<vmem>>, %arg5: memref<128x128xf32, #tpu.memory_space<vmem>>) attributes {dimension_semantics = [#tpu.dimension_semantics<parallel>, #tpu.dimension_semantics<parallel>], iteration_bounds = array<i64: 1, 1>, scalar_prefetch = 0 : i64, scratch_operands = 0 : i64, tpu.core_type = #tpu.core_type<tc>, window_params = [{transform_indices = @transform_0, window_bounds = array<i64: 128, 4>}, {transform_indices = @transform_1, window_bounds = array<i64: 4, 128>}, {transform_indices = @transform_2, window_bounds = array<i64: 1, 128>}, {transform_indices = @transform_3, window_bounds = array<i64: 128, 128>}]} {
    %c0 = arith.constant 0 : index
    %c0_0 = arith.constant 0 : index
    %0 = vector.load %arg2[%c0, %c0_0] : memref<128x4xf32, #tpu.memory_space<vmem>>, vector<128x4xf32>
    %c0_1 = arith.constant 0 : index
    %c0_2 = arith.constant 0 : index
    %1 = vector.load %arg3[%c0_1, %c0_2] : memref<4x128xf32, #tpu.memory_space<vmem>>, vector<4x128xf32>
    %cst = arith.constant dense<0.000000e+00> : vector<128x128xf32>
    %2 = tpu.matmul %0, %1, %cst {dimension_numbers = #tpu.dot_dimension_numbers<[1], [0], [0], [1], [0, 0, 1, 1], [], []>} : vector<128x4xf32>, vector<4x128xf32>, vector<128x128xf32> -> vector<128x128xf32>
    %c0_3 = arith.constant 0 : index
    %c0_4 = arith.constant 0 : index
    %3 = vector.load %arg4[%c0_3, %c0_4] : memref<1x128xf32, #tpu.memory_space<vmem>>, vector<1x128xf32>
    %4 = vector.broadcast %3 : vector<1x128xf32> to vector<128x128xf32>
    %5 = arith.addf %2, %4 : vector<128x128xf32>
    %c0_5 = arith.constant 0 : index
    %c0_6 = arith.constant 0 : index
    %6 = vector.load %arg5[%c0_5, %c0_6] : memref<128x128xf32, #tpu.memory_space<vmem>>, vector<128x128xf32>
    tpu.vector_store %arg5[%c0_5, %c0_6], %5 {strides = array<i32>} : memref<128x128xf32, #tpu.memory_space<vmem>>, vector<128x128xf32>,
    return
  }
  func.func @transform_0(%arg0: i32, %arg1: i32) -> (i32, i32) {
    %c0_i32 = arith.constant 0 : i32
    %c0_i32_0 = arith.constant 0 : i32
    return %arg1, %c0_i32 : i32, i32
  }
  func.func @transform_1(%arg0: i32, %arg1: i32) -> (i32, i32) {
    %c0_i32 = arith.constant 0 : i32
    %c0_i32_0 = arith.constant 0 : i32
    return %c0_i32, %arg0 : i32, i32
  }
  func.func @transform_2(%arg0: i32, %arg1: i32) -> (i32, i32) {
    %c0_i32 = arith.constant 0 : i32
    %c0_i32_0 = arith.constant 0 : i32
    return %c0_i32, %arg0 : i32, i32
  }
  func.func @transform_3(%arg0: i32, %arg1: i32) -> (i32, i32) {
    %c0_i32 = arith.constant 0 : i32
    return %arg1, %arg0 : i32, i32
  }
}

</mosaic_0001>

<llo_original>
// kernel: tpu_custom_call.1
$region0: #{tpu_custom_call.1}
  #allocation0 [shape = 'u32[]', space=smem, size = 0x4, offset = 0x4, fixed_abs, tag = 'smem constant byte address 0x4 - core index']
  #allocation1 [shape = 'u32[144,128]{1,0:T(1,128)}', space=vmem, size = 0x12000, scoped, tag = 'internal scratch']
  %s0 = inlined_call_operand.vmem [shape: f32[128,4], index: 0, kind: input, shape index: {}]
  %s1 = inlined_call_operand.vmem [shape: f32[4,128], index: 1, kind: input, shape index: {}]
  %s2 = inlined_call_operand.vmem [shape: f32[1,128], index: 2, kind: input, shape index: {}]
  %s3 = inlined_call_operand.hbm [shape: f32[128,128], index: 3, kind: output, shape index: {}]
  %s4 = sld [smem:[#allocation0]]
  $region22: #{tpu_custom_call.1} parent=0
    _
  %s6 = ssub.s32 1, %s4
  %s7 = scalar_select 0, %s6, %s4
  $region1: #{tpu_custom_call.1} parent=0
    #allocation2 [shape = 'u8[65536]{0}', space=vmem, size = 0x10000, scoped, tag = 'output window, operand 0, single buffered']
    #allocation3 [shape = 's32[1]{0}', space=sflag, size = 0x4, scoped, tag = 'scoped memory for tpu_custom_call.1']
    %8 = vsyncpa [#allocation3], 0
    // Predicated region
    $region2: #{tpu_custom_call.1} parent=1 // pred_check
      _
    $region3: #{tpu_custom_call.1} parent=1 // pred_check_branch
      %10 = sbr.rel (0) target = $region5
    $region4: #{tpu_custom_call.1} parent=1 // pred_region
      _
    $region5: #{tpu_custom_call.1} parent=1 // pred_fallthru
      _
    // Predicated region
    $region6: #{tpu_custom_call.1} parent=1 // pred_check
      _
    $region7: #{tpu_custom_call.1} parent=1 // pred_check_branch
      %12 = sbr.rel (0) target = $region9
    $region8: #{tpu_custom_call.1} parent=1 // pred_region
      _
    $region9: #{tpu_custom_call.1} parent=1 // pred_fallthru
      _
    // Predicated region
    $region10: #{tpu_custom_call.1} parent=1 // pred_check
      _
    $region11: #{tpu_custom_call.1} parent=1 // pred_check_branch
      %14 = sbr.rel (0) target = $region13
    $region12: #{tpu_custom_call.1} parent=1 // pred_region
      _
    $region13: #{tpu_custom_call.1} parent=1 // pred_fallthru
      _
    %v15 = vld [vmem:[%s0] sm:$0xff]
    %v16 = vld [vmem:[%s0 + $0x8] sm:$0xff]
    %v17 = vld [vmem:[%s0 + $0x10] sm:$0xff]
    %v18 = vld [vmem:[%s0 + $0x18] sm:$0xff]
    %v19 = vld [vmem:[%s0 + $0x20] sm:$0xff]
    %v20 = vld [vmem:[%s0 + $0x28] sm:$0xff]
    %v21 = vld [vmem:[%s0 + $0x30] sm:$0xff]
    %v22 = vld [vmem:[%s0 + $0x38] sm:$0xff]
    %v23 = vld [vmem:[%s0 + $0x40] sm:$0xff]
    %v24 = vld [vmem:[%s0 + $0x48] sm:$0xff]
    %v25 = vld [vmem:[%s0 + $0x50] sm:$0xff]
    %v26 = vld [vmem:[%s0 + $0x58] sm:$0xff]
    %v27 = vld [vmem:[%s0 + $0x60] sm:$0xff]
    %v28 = vld [vmem:[%s0 + $0x68] sm:$0xff]
    %v29 = vld [vmem:[%s0 + $0x70] sm:$0xff]
    %v30 = vld [vmem:[%s0 + $0x78] sm:$0xff]
    %v31 = vld [vmem:[%s1] sm:$0xf]
    %v32 = vld [vmem:[%s2] sm:$0x1]
    %v34 = vlaneseq
    %v35 = vshrl.u32 %v34, 7
    %v36 = vsub.s32 0, %v35
    %v37 = vrot.slane %v32, %v36
    %vm39 = vcmask 31744
    %v41 = vsel %vm39, %v15, 0
    %v44 = vsel %vm39, %v16, 0
    %v47 = vsel %vm39, %v17, 0
    %v50 = vsel %vm39, %v18, 0
    %v53 = vsel %vm39, %v19, 0
    %v56 = vsel %vm39, %v20, 0
    %v59 = vsel %vm39, %v21, 0
    %v62 = vsel %vm39, %v22, 0
    %v65 = vsel %vm39, %v23, 0
    %v68 = vsel %vm39, %v24, 0
    %v71 = vsel %vm39, %v25, 0
    %v74 = vsel %vm39, %v26, 0
    %v77 = vsel %vm39, %v27, 0
    %v80 = vsel %vm39, %v28, 0
    %v83 = vsel %vm39, %v29, 0
    %v86 = vsel %vm39, %v30, 0
    %vm88 = vcmask 1043456
    %v90 = vsel %vm88, %v31, 0
    %92 = vmatprep.subr.mxu0 0.0
    %93 = vmatpush1.msra.mxu0 %v90
    %94 = vmatprep.subr.mxu0 0.0
    %95 = vmatpush1.msra.mxu0 0.0
    %96 = vmatprep.subr.mxu0 0.0
    %97 = vmatpush1.msra.mxu0 0.0
    %98 = vmatprep.subr.mxu0 0.0
    %99 = vmatpush1.msra.mxu0 0.0
    %100 = vmatprep.subr.mxu0 0.0
    %101 = vmatpush1.msra.mxu0 0.0
    %102 = vmatprep.subr.mxu0 0.0
    %103 = vmatpush1.msra.mxu0 0.0
    %104 = vmatprep.subr.mxu0 0.0
    %105 = vmatpush1.msra.mxu0 0.0
    %106 = vmatprep.subr.mxu0 0.0
    %107 = vmatpush1.msra.mxu0 0.0
    %108 = vmatprep.subr.mxu0 0.0
    %109 = vmatpush1.msra.mxu0 0.0
    %110 = vmatprep.subr.mxu0 0.0
    %111 = vmatpush1.msra.mxu0 0.0
    %112 = vmatprep.subr.mxu0 0.0
    %113 = vmatpush1.msra.mxu0 0.0
    %114 = vmatprep.subr.mxu0 0.0
    %115 = vmatpush1.msra.mxu0 0.0
    %116 = vmatprep.subr.mxu0 0.0
    %117 = vmatpush1.msra.mxu0 0.0
    %118 = vmatprep.subr.mxu0 0.0
    %119 = vmatpush1.msra.mxu0 0.0
    %120 = vmatprep.subr.mxu0 0.0
    %121 = vmatpush1.msra.mxu0 0.0
    %122 = vmatprep.subr.mxu0 0.0
    %123 = vmatpush1.msra.mxu0 0.0
    %124 = vmatprep.subr.mxu0 0.0
    %125 = vmatpush1.msra.mxu0 0.0
    %126 = vmatprep.subr.mxu0 0.0
    %127 = vmatpush1.msra.mxu0 0.0
    %128 = vmatprep.subr.mxu0 0.0
    %129 = vmatpush1.msra.mxu0 0.0
    %130 = vmatprep.subr.mxu0 0.0
    %131 = vmatpush1.msra.mxu0 0.0
    %132 = vmatprep.subr.mxu0 0.0
    %133 = vmatpush1.msra.mxu0 0.0
    %134 = vmatprep.subr.mxu0 0.0
    %135 = vmatpush1.msra.mxu0 0.0
    %136 = vmatprep.subr.mxu0 0.0
    %137 = vmatpush1.msra.mxu0 0.0
    %138 = vmatprep.subr.mxu0 0.0
    %139 = vmatpush1.msra.mxu0 0.0
    %140 = vmatprep.subr.mxu0 0.0
    %141 = vmatpush1.msra.mxu0 0.0
    %142 = vmatprep.subr.mxu0 0.0
    %143 = vmatpush1.msra.mxu0 0.0
    %144 = vmatprep.subr.mxu0 0.0
    %145 = vmatpush1.msra.mxu0 0.0
    %146 = vmatprep.subr.mxu0 0.0
    %147 = vmatpush1.msra.mxu0 0.0
    %148 = vmatprep.subr.mxu0 0.0
    %149 = vmatpush1.msra.mxu0 0.0
    %150 = vmatprep.subr.mxu0 0.0
    %151 = vmatpush1.msra.mxu0 0.0
    %152 = vmatprep.subr.mxu0 0.0
    %153 = vmatpush1.msra.mxu0 0.0
    %154 = vmatprep.subr.mxu0 0.0
    %155 = vmatpush1.msra.mxu0 0.0
    %156 = vmatprep.mubr.f32.mxu0 0.0
    %157 = vmatmul.mubr.f32.gmra.mrb[0].mxu0 %v41
    %v158 = vpop.f32.mrb[0].mxu0
    %v159 = vadd.f32 %v37, %v158
    %v160 = vpop.f32.mrb[0].mxu0
    %161 = vmatprep.mubr.f32.mxu0 0.0
    %162 = vmatmul.mubr.f32.gmra.mrb[0].mxu0 %v44
    %v163 = vpop.f32.mrb[0].mxu0
    %v164 = vadd.f32 %v37, %v163
    %v165 = vpop.f32.mrb[0].mxu0
    %166 = vmatprep.mubr.f32.mxu0 0.0
    %167 = vmatmul.mubr.f32.gmra.mrb[0].mxu0 %v47
    %v168 = vpop.f32.mrb[0].mxu0
    %v169 = vadd.f32 %v37, %v168
    %v170 = vpop.f32.mrb[0].mxu0
    %171 = vmatprep.mubr.f32.mxu0 0.0
    %172 = vmatmul.mubr.f32.gmra.mrb[0].mxu0 %v50
    %v173 = vpop.f32.mrb[0].mxu0
    %v174 = vadd.f32 %v37, %v173
    %v175 = vpop.f32.mrb[0].mxu0
    %176 = vmatprep.mubr.f32.mxu0 0.0
    %177 = vmatmul.mubr.f32.gmra.mrb[0].mxu0 %v53
    %v178 = vpop.f32.mrb[0].mxu0
    %v179 = vadd.f32 %v37, %v178
    %v180 = vpop.f32.mrb[0].mxu0
    %181 = vmatprep.mubr.f32.mxu0 0.0
    %182 = vmatmul.mubr.f32.gmra.mrb[0].mxu0 %v56
    %v183 = vpop.f32.mrb[0].mxu0
    %v184 = vadd.f32 %v37, %v183
    %v185 = vpop.f32.mrb[0].mxu0
    %186 = vmatprep.mubr.f32.mxu0 0.0
    %187 = vmatmul.mubr.f32.gmra.mrb[0].mxu0 %v59
    %v188 = vpop.f32.mrb[0].mxu0
    %v189 = vadd.f32 %v37, %v188
    %v190 = vpop.f32.mrb[0].mxu0
    %191 = vmatprep.mubr.f32.mxu0 0.0
    %192 = vmatmul.mubr.f32.gmra.mrb[0].mxu0 %v62
    %v193 = vpop.f32.mrb[0].mxu0
    %v194 = vadd.f32 %v37, %v193
    %v195 = vpop.f32.mrb[0].mxu0
    %196 = vmatprep.mubr.f32.mxu0 0.0
    %197 = vmatmul.mubr.f32.gmra.mrb[0].mxu0 %v65
    %v198 = vpop.f32.mrb[0].mxu0
    %v199 = vadd.f32 %v37, %v198
    %v200 = vpop.f32.mrb[0].mxu0
    %201 = vmatprep.mubr.f32.mxu0 0.0
    %202 = vmatmul.mubr.f32.gmra.mrb[0].mxu0 %v68
    %v203 = vpop.f32.mrb[0].mxu0
    %v204 = vadd.f32 %v37, %v203
    %v205 = vpop.f32.mrb[0].mxu0
    %206 = vmatprep.mubr.f32.mxu0 0.0
    %207 = vmatmul.mubr.f32.gmra.mrb[0].mxu0 %v71
    %v208 = vpop.f32.mrb[0].mxu0
    %v209 = vadd.f32 %v37, %v208
    %v210 = vpop.f32.mrb[0].mxu0
    %211 = vmatprep.mubr.f32.mxu0 0.0
    %212 = vmatmul.mubr.f32.gmra.mrb[0].mxu0 %v74
    %v213 = vpop.f32.mrb[0].mxu0
    %v214 = vadd.f32 %v37, %v213
    %v215 = vpop.f32.mrb[0].mxu0
    %216 = vmatprep.mubr.f32.mxu0 0.0
    %217 = vmatmul.mubr.f32.gmra.mrb[0].mxu0 %v77
    %v218 = vpop.f32.mrb[0].mxu0
    %v219 = vadd.f32 %v37, %v218
    %v220 = vpop.f32.mrb[0].mxu0
    %221 = vmatprep.mubr.f32.mxu0 0.0
    %222 = vmatmul.mubr.f32.gmra.mrb[0].mxu0 %v80
    %v223 = vpop.f32.mrb[0].mxu0
    %v224 = vadd.f32 %v37, %v223
    %v225 = vpop.f32.mrb[0].mxu0
    %226 = vmatprep.mubr.f32.mxu0 0.0
    %227 = vmatmul.mubr.f32.gmra.mrb[0].mxu0 %v83
    %v228 = vpop.f32.mrb[0].mxu0
    %v229 = vadd.f32 %v37, %v228
    %v230 = vpop.f32.mrb[0].mxu0
    %231 = vmatprep.mubr.f32.mxu0 0.0
    %232 = vmatmul.mubr.f32.gmra.mrb[0].mxu0 %v86
    %v233 = vpop.f32.mrb[0].mxu0
    %v234 = vadd.f32 %v37, %v233
    %v235 = vpop.f32.mrb[0].mxu0
    %236 = vdwg.mxu0
    %237 = vst [vmem:[#allocation2] sm:$0xff] %v159
    %238 = vst [vmem:[#allocation2 + $0x8] sm:$0xff] %v164
    %239 = vst [vmem:[#allocation2 + $0x10] sm:$0xff] %v169
    %240 = vst [vmem:[#allocation2 + $0x18] sm:$0xff] %v174
    %241 = vst [vmem:[#allocation2 + $0x20] sm:$0xff] %v179
    %242 = vst [vmem:[#allocation2 + $0x28] sm:$0xff] %v184
    %243 = vst [vmem:[#allocation2 + $0x30] sm:$0xff] %v189
    %244 = vst [vmem:[#allocation2 + $0x38] sm:$0xff] %v194
    %245 = vst [vmem:[#allocation2 + $0x40] sm:$0xff] %v199
    %246 = vst [vmem:[#allocation2 + $0x48] sm:$0xff] %v204
    %247 = vst [vmem:[#allocation2 + $0x50] sm:$0xff] %v209
    %248 = vst [vmem:[#allocation2 + $0x58] sm:$0xff] %v214
    %249 = vst [vmem:[#allocation2 + $0x60] sm:$0xff] %v219
    %250 = vst [vmem:[#allocation2 + $0x68] sm:$0xff] %v224
    %251 = vst [vmem:[#allocation2 + $0x70] sm:$0xff] %v229
    %252 = vst [vmem:[#allocation2 + $0x78] sm:$0xff] %v234
    // Predicated region
    $region14: #{tpu_custom_call.1} parent=1 // pred_check
      _
    $region15: #{tpu_custom_call.1} parent=1 // pred_check_branch
      %254 = sbr.rel (0) target = $region17
    $region16: #{tpu_custom_call.1} parent=1 // pred_region
      %s256 = ssub.s32 2048, 2048
      %257 = vsyncadd [#allocation3], %s256
      %s258 = sshll.u32 [#allocation2], 4
      %s259 = int_to_ptr.vmem [resolvable:$true] %s258
      %264 = dma.vmem_to_hbm [thread:$0]  %s259, 2048, %s3, [#allocation3], 128, 128, 8
    $region17: #{tpu_custom_call.1} parent=1 // pred_fallthru
      _
    // Predicated region
    $region18: #{tpu_custom_call.1} parent=1 // pred_check
      _
    $region19: #{tpu_custom_call.1} parent=1 // pred_check_branch
      %266 = sbr.rel (0) target = $region21
    $region20: #{tpu_custom_call.1} parent=1 // pred_region
      %267 = dma.done [#allocation3], 2048
    $region21: #{tpu_custom_call.1} parent=1 // pred_fallthru
      _
    %268 = vsyncpa [#allocation3], 1

</llo_original>
